<compile_context>
chip_gen: v6e
topology: v6e:2x2x1
jax: 0.10.0
libtpu: 0.0.40
codegen_flags: <defaults>
</compile_context>

<pallas_src>
import jax
import jax.numpy as jnp
from jax.experimental import pallas as pl
from jax.experimental.pallas import tpu as pltpu


def _round_up(x, m):
    return ((x + m - 1) // m) * m


def _actor_kernel(ma_ref, x_ref, w1_ref, b1_ref, w2_ref, b2_ref,
                  w3_ref, b3_ref, o_ref):
    """relu(x@W1+b1) -> relu(.@W2+b2) -> tanh(.@W3+b3) * max_action."""
    max_action = ma_ref[0, 0]                       # SMEM scalar (f32)

    x = x_ref[...]                                  # bf16 (bt, S_pad)

    # layer 1: bf16 inputs, f32 accumulation on the MXU; bias/ReLU in f32.
    h1 = jnp.dot(x, w1_ref[...], preferred_element_type=jnp.float32) + b1_ref[...]
    h1 = jnp.maximum(h1, 0.0)

    # layer 2
    h2 = jnp.dot(h1.astype(jnp.bfloat16), w2_ref[...],
                 preferred_element_type=jnp.float32) + b2_ref[...]
    h2 = jnp.maximum(h2, 0.0)

    # layer 3 + tanh (EUP slot, free under MXU/VPU work) + max_action scale.
    # Output block is lane-dense (A_pad = multiple of 128 columns).
    a = jnp.dot(h2.astype(jnp.bfloat16), w3_ref[...],
                preferred_element_type=jnp.float32) + b3_ref[...]
    o_ref[...] = (jnp.tanh(a) * max_action).astype(o_ref.dtype)


def actor_forward(state, params, max_action, *, batch_tile=256):
    """state: (B, state_dim) f32; params: dict of w1,b1,w2,b2,w3,b3 (W is (in,out))."""
    B, state_dim = state.shape
    hidden = params["w1"].shape[1]
    action_dim = params["w3"].shape[1]

    f32, bf16 = jnp.float32, jnp.bfloat16

    # Padded sizes: lanes (last dim) to multiples of 128, batch tile to mult. of 8.
    S_pad = _round_up(state_dim, 128)
    A_pad = _round_up(action_dim, 128)
    bt = _round_up(max(8, min(batch_tile, _round_up(B, 8))), 8)
    B_pad = _round_up(B, bt)
    n_tiles = B_pad // bt

    # Inputs: zero-pad (padding columns/rows contribute nothing), cast to bf16.
    x = jnp.zeros((B_pad, S_pad), bf16).at[:B, :state_dim].set(state.astype(bf16))
    w1 = jnp.zeros((S_pad, hidden), bf16).at[:state_dim, :].set(params["w1"].astype(bf16))
    b1 = params["b1"].astype(f32)
    w2 = params["w2"].astype(bf16)
    b2 = params["b2"].astype(f32)
    w3 = jnp.zeros((hidden, A_pad), bf16).at[:, :action_dim].set(params["w3"].astype(bf16))
    b3 = jnp.zeros((1, A_pad), f32).at[:, :action_dim].set(params["b3"].astype(f32))

    ma = jnp.full((1, 1), max_action, f32)          # SMEM scalar, no retrace on change

    const = lambda shape: pl.BlockSpec(shape, lambda i: (0, 0))  # VMEM-resident blocks

    out = pl.pallas_call(
        _actor_kernel,
        out_shape=jax.ShapeDtypeStruct((B_pad, A_pad), f32),
        grid=(n_tiles,),
        in_specs=[
            pl.BlockSpec(memory_space=pltpu.MemorySpace.SMEM),   # max_action
            pl.BlockSpec((bt, S_pad), lambda i: (i, 0)),         # state tile (streams)
            const((S_pad, hidden)), const((1, hidden)),          # w1, b1 (resident)
            const((hidden, hidden)), const((1, hidden)),         # w2, b2 (resident)
            const((hidden, A_pad)), const((1, A_pad)),           # w3, b3 (resident)
        ],
        out_specs=pl.BlockSpec((bt, A_pad), lambda i: (i, 0)),   # lane-dense output
        compiler_params=pltpu.CompilerParams(
            dimension_semantics=("parallel",)),                  # megacore on v7x
    )(ma, x, w1, b1, w2, b2, w3, b3)

    return out[:B, :action_dim]


def init_actor_params(key, state_dim, action_dim, hidden=256):
    """Deterministic synthetic init mimicking nn.Linear's U(-1/sqrt(fan_in), +)."""
    ks = jax.random.split(key, 6)

    def linear(kw, kb, fan_in, fan_out):
        bound = 1.0 / jnp.sqrt(fan_in)
        w = jax.random.uniform(kw, (fan_in, fan_out), jnp.float32, -bound, bound)
        b = jax.random.uniform(kb, (1, fan_out), jnp.float32, -bound, bound)
        return w, b

    w1, b1 = linear(ks[0], ks[1], state_dim, hidden)
    w2, b2 = linear(ks[2], ks[3], hidden, hidden)
    w3, b3 = linear(ks[4], ks[5], hidden, action_dim)
    return {"w1": w1, "b1": b1, "w2": w2, "b2": b2, "w3": w3, "b3": b3}


def actor_reference_f32(state, params, max_action):
    h1 = jnp.maximum(state @ params["w1"] + params["b1"], 0.0)
    h2 = jnp.maximum(h1 @ params["w2"] + params["b2"], 0.0)
    return jnp.tanh(h2 @ params["w3"] + params["b3"]) * max_action


def actor_reference_bf16(state, params, max_action):
    """Reference that mirrors the kernel's numerics (bf16 matmul inputs, f32 acc)."""
    bf16, f32 = jnp.bfloat16, jnp.float32
    h1 = jnp.dot(state.astype(bf16), params["w1"].astype(bf16),
                 preferred_element_type=f32) + params["b1"]
    h1 = jnp.maximum(h1, 0.0)
    h2 = jnp.dot(h1.astype(bf16), params["w2"].astype(bf16),
                 preferred_element_type=f32) + params["b2"]
    h2 = jnp.maximum(h2, 0.0)
    a = jnp.dot(h2.astype(bf16), params["w3"].astype(bf16),
                preferred_element_type=f32) + params["b3"]
    return jnp.tanh(a) * max_action


if __name__ == "__main__":
    key = jax.random.PRNGKey(0)
    k_state, k_params = jax.random.split(key)

    batch = 64
    state_dim = 32
    action_dim = 8
    max_action = 2.0

    state = jax.random.normal(k_state, (batch, state_dim), jnp.float32)
    params = init_actor_params(k_params, state_dim, action_dim)

    # Small batch_tile so this tiny example still exercises a multi-step grid
    # with VMEM-resident weights; production would use batch_tile=256..1024.
    out = actor_forward(state, params, max_action, batch_tile=16)
    out = jax.block_until_ready(out)

    ref_bf16 = actor_reference_bf16(state, params, max_action)
    ref_f32 = actor_reference_f32(state, params, max_action)

    assert out.shape == (batch, action_dim)
    assert jnp.allclose(out, ref_bf16, atol=1e-2, rtol=1e-2), "mismatch vs bf16 reference"
    assert jnp.allclose(out, ref_f32, atol=6e-2, rtol=6e-2), "mismatch vs f32 reference"

    print("KERNEL_OK")
</pallas_src>

<mosaic_0001>
module attributes {stable_mosaic.version = 11 : i64} {
  func.func @_actor_kernel(%arg0: i32, %arg1: memref<1x1xf32, #tpu.memory_space<smem>>, %arg2: memref<16x128xbf16, #tpu.memory_space<vmem>>, %arg3: memref<128x256xbf16, #tpu.memory_space<vmem>>, %arg4: memref<1x256xf32, #tpu.memory_space<vmem>>, %arg5: memref<256x256xbf16, #tpu.memory_space<vmem>>, %arg6: memref<1x256xf32, #tpu.memory_space<vmem>>, %arg7: memref<256x128xbf16, #tpu.memory_space<vmem>>, %arg8: memref<1x128xf32, #tpu.memory_space<vmem>>, %arg9: memref<16x128xf32, #tpu.memory_space<vmem>>) attributes {dimension_semantics = [#tpu.dimension_semantics<parallel>], iteration_bounds = array<i64: 4>, scalar_prefetch = 0 : i64, scratch_operands = 0 : i64, tpu.core_type = #tpu.core_type<tc>, window_params = [{transform_indices = @transform_0, window_bounds = array<i64: 1, 1>}, {transform_indices = @transform_1, window_bounds = array<i64: 16, 128>}, {pipeline_mode = #tpu.pipeline_mode<synchronous>, transform_indices = @transform_2, window_bounds = array<i64: 128, 256>}, {pipeline_mode = #tpu.pipeline_mode<synchronous>, transform_indices = @transform_3, window_bounds = array<i64: 1, 256>}, {pipeline_mode = #tpu.pipeline_mode<synchronous>, transform_indices = @transform_4, window_bounds = array<i64: 256, 256>}, {pipeline_mode = #tpu.pipeline_mode<synchronous>, transform_indices = @transform_5, window_bounds = array<i64: 1, 256>}, {pipeline_mode = #tpu.pipeline_mode<synchronous>, transform_indices = @transform_6, window_bounds = array<i64: 256, 128>}, {pipeline_mode = #tpu.pipeline_mode<synchronous>, transform_indices = @transform_7, window_bounds = array<i64: 1, 128>}, {transform_indices = @transform_8, window_bounds = array<i64: 16, 128>}]} {
    %c0 = arith.constant 0 : index
    %c0_0 = arith.constant 0 : index
    %0 = memref.load %arg1[%c0, %c0_0] : memref<1x1xf32, #tpu.memory_space<smem>>
    %c0_1 = arith.constant 0 : index
    %c0_2 = arith.constant 0 : index
    %1 = vector.load %arg2[%c0_1, %c0_2] : memref<16x128xbf16, #tpu.memory_space<vmem>>, vector<16x128xbf16>
    %c0_3 = arith.constant 0 : index
    %c0_4 = arith.constant 0 : index
    %2 = vector.load %arg3[%c0_3, %c0_4] : memref<128x256xbf16, #tpu.memory_space<vmem>>, vector<128x256xbf16>
    %cst = arith.constant dense<0.000000e+00> : vector<16x256xf32>
    %3 = tpu.matmul %1, %2, %cst {dimension_numbers = #tpu.dot_dimension_numbers<[1], [0], [0], [1], [0, 0, 1, 1], [], []>} : vector<16x128xbf16>, vector<128x256xbf16>, vector<16x256xf32> -> vector<16x256xf32>
    %c0_5 = arith.constant 0 : index
    %c0_6 = arith.constant 0 : index
    %4 = vector.load %arg4[%c0_5, %c0_6] : memref<1x256xf32, #tpu.memory_space<vmem>>, vector<1x256xf32>
    %5 = vector.broadcast %4 : vector<1x256xf32> to vector<16x256xf32>
    %6 = arith.addf %3, %5 : vector<16x256xf32>
    %cst_7 = arith.constant 0.000000e+00 : f32
    %7 = vector.broadcast %cst_7 : f32 to vector<16x256xf32>
    %8 = arith.maximumf %6, %7 : vector<16x256xf32>
    %9 = arith.truncf %8 : vector<16x256xf32> to vector<16x256xbf16>
    %c0_8 = arith.constant 0 : index
    %c0_9 = arith.constant 0 : index
    %10 = vector.load %arg5[%c0_8, %c0_9] : memref<256x256xbf16, #tpu.memory_space<vmem>>, vector<256x256xbf16>
    %cst_10 = arith.constant dense<0.000000e+00> : vector<16x256xf32>
    %11 = tpu.matmul %9, %10, %cst_10 {dimension_numbers = #tpu.dot_dimension_numbers<[1], [0], [0], [1], [0, 0, 1, 1], [], []>} : vector<16x256xbf16>, vector<256x256xbf16>, vector<16x256xf32> -> vector<16x256xf32>
    %c0_11 = arith.constant 0 : index
    %c0_12 = arith.constant 0 : index
    %12 = vector.load %arg6[%c0_11, %c0_12] : memref<1x256xf32, #tpu.memory_space<vmem>>, vector<1x256xf32>
    %13 = vector.broadcast %12 : vector<1x256xf32> to vector<16x256xf32>
    %14 = arith.addf %11, %13 : vector<16x256xf32>
    %cst_13 = arith.constant 0.000000e+00 : f32
    %15 = vector.broadcast %cst_13 : f32 to vector<16x256xf32>
    %16 = arith.maximumf %14, %15 : vector<16x256xf32>
    %17 = arith.truncf %16 : vector<16x256xf32> to vector<16x256xbf16>
    %c0_14 = arith.constant 0 : index
    %c0_15 = arith.constant 0 : index
    %18 = vector.load %arg7[%c0_14, %c0_15] : memref<256x128xbf16, #tpu.memory_space<vmem>>, vector<256x128xbf16>
    %cst_16 = arith.constant dense<0.000000e+00> : vector<16x128xf32>
    %19 = tpu.matmul %17, %18, %cst_16 {dimension_numbers = #tpu.dot_dimension_numbers<[1], [0], [0], [1], [0, 0, 1, 1], [], []>} : vector<16x256xbf16>, vector<256x128xbf16>, vector<16x128xf32> -> vector<16x128xf32>
    %c0_17 = arith.constant 0 : index
    %c0_18 = arith.constant 0 : index
    %20 = vector.load %arg8[%c0_17, %c0_18] : memref<1x128xf32, #tpu.memory_space<vmem>>, vector<1x128xf32>
    %21 = vector.broadcast %20 : vector<1x128xf32> to vector<16x128xf32>
    %22 = arith.addf %19, %21 : vector<16x128xf32>
    %23 = math.tanh %22 : vector<16x128xf32>
    %24 = vector.broadcast %0 : f32 to vector<16x128xf32>
    %25 = arith.mulf %23, %24 : vector<16x128xf32>
    %c0_19 = arith.constant 0 : index
    %c0_20 = arith.constant 0 : index
    %26 = vector.load %arg9[%c0_19, %c0_20] : memref<16x128xf32, #tpu.memory_space<vmem>>, vector<16x128xf32>
    tpu.vector_store %arg9[%c0_19, %c0_20], %25 {strides = array<i32>} : memref<16x128xf32, #tpu.memory_space<vmem>>, vector<16x128xf32>,
    return
  }
  func.func @transform_0(%arg0: i32) -> (i32, i32) {
    %c0_i32 = arith.constant 0 : i32
    %c0_i32_0 = arith.constant 0 : i32
    %c0_i32_1 = arith.constant 0 : i32
    return %c0_i32, %c0_i32_0 : i32, i32
  }
  func.func @transform_1(%arg0: i32) -> (i32, i32) {
    %c0_i32 = arith.constant 0 : i32
    %c0_i32_0 = arith.constant 0 : i32
    return %arg0, %c0_i32 : i32, i32
  }
  func.func @transform_2(%arg0: i32) -> (i32, i32) {
    %c0_i32 = arith.constant 0 : i32
    %c0_i32_0 = arith.constant 0 : i32
    %c0_i32_1 = arith.constant 0 : i32
    return %c0_i32, %c0_i32_0 : i32, i32
  }
  func.func @transform_3(%arg0: i32) -> (i32, i32) {
    %c0_i32 = arith.constant 0 : i32
    %c0_i32_0 = arith.constant 0 : i32
    %c0_i32_1 = arith.constant 0 : i32
    return %c0_i32, %c0_i32_0 : i32, i32
  }
  func.func @transform_4(%arg0: i32) -> (i32, i32) {
    %c0_i32 = arith.constant 0 : i32
    %c0_i32_0 = arith.constant 0 : i32
    %c0_i32_1 = arith.constant 0 : i32
    return %c0_i32, %c0_i32_0 : i32, i32
  }
  func.func @transform_5(%arg0: i32) -> (i32, i32) {
    %c0_i32 = arith.constant 0 : i32
    %c0_i32_0 = arith.constant 0 : i32
    %c0_i32_1 = arith.constant 0 : i32
    return %c0_i32, %c0_i32_0 : i32, i32
  }
  func.func @transform_6(%arg0: i32) -> (i32, i32) {
    %c0_i32 = arith.constant 0 : i32
    %c0_i32_0 = arith.constant 0 : i32
    %c0_i32_1 = arith.constant 0 : i32
    return %c0_i32, %c0_i32_0 : i32, i32
  }
  func.func @transform_7(%arg0: i32) -> (i32, i32) {
    %c0_i32 = arith.constant 0 : i32
    %c0_i32_0 = arith.constant 0 : i32
    %c0_i32_1 = arith.constant 0 : i32
    return %c0_i32, %c0_i32_0 : i32, i32
  }
  func.func @transform_8(%arg0: i32) -> (i32, i32) {
    %c0_i32 = arith.constant 0 : i32
    %c0_i32_0 = arith.constant 0 : i32
    return %arg0, %c0_i32 : i32, i32
  }
}

</mosaic_0001>

<llo_original>
// kernel: tpu_custom_call.1
$region0: #{tpu_custom_call.1}
  #allocation0 [shape = 'u32[]', space=smem, size = 0x4, offset = 0x4, fixed_abs, tag = 'smem constant byte address 0x4 - core index']
  #allocation1 [shape = 'u32[144,128]{1,0:T(1,128)}', space=vmem, size = 0x12000, scoped, tag = 'internal scratch']
  #allocation2 [shape = 'f32[1,1]{1,0:T(1,128)S(6)}', space=smem, size = 0x200, scoped, tag = 'scoped memory for tpu_custom_call.1']
  %s0 = inlined_call_operand.<no memory space> [shape: f32[1,1], index: 0, kind: input, shape index: {}]
  %s1 = inlined_call_operand.hbm [shape: bf16[64,128], index: 1, kind: input, shape index: {}]
  %s2 = inlined_call_operand.hbm [shape: bf16[128,256], index: 2, kind: input, shape index: {}]
  %s3 = inlined_call_operand.vmem [shape: f32[1,256], index: 3, kind: input, shape index: {}]
  %s4 = inlined_call_operand.hbm [shape: bf16[256,256], index: 4, kind: input, shape index: {}]
  %s5 = inlined_call_operand.vmem [shape: f32[1,256], index: 5, kind: input, shape index: {}]
  %s6 = inlined_call_operand.hbm [shape: bf16[256,128], index: 6, kind: input, shape index: {}]
  %s7 = inlined_call_operand.vmem [shape: f32[1,128], index: 7, kind: input, shape index: {}]
  %s8 = inlined_call_operand.hbm [shape: f32[64,128], index: 8, kind: output, shape index: {}]
  %s9 = sld [smem:[#allocation0]]
  $region81: #{tpu_custom_call.1} parent=0
    _
  %s11 = ssub.s32 1, %s9
  %s12 = scalar_select 0, %s11, %s9
  %13 = sst [smem:[#allocation2]] %s0
  $region1: #{tpu_custom_call.1} parent=0
    #allocation3 [shape = 'u8[8192]{0}', space=vmem, size = 0x2000, scoped, tag = 'input window, operand 1']
    #allocation4 [shape = 's32[2]{0}', space=sflag, size = 0x8, scoped, tag = 'scoped memory for tpu_custom_call.1']
    #allocation5 [shape = 's32[2]{0}', space=sflag, size = 0x8, scoped, tag = 'scoped memory for tpu_custom_call.1']
    #allocation6 [shape = 'u8[65536]{0}', space=vmem, size = 0x10000, scoped, tag = 'input window, operand 2, single buffered']
    #allocation7 [shape = 's32[1]{0}', space=sflag, size = 0x4, scoped, tag = 'scoped memory for tpu_custom_call.1']
    #allocation8 [shape = 'u8[131072]{0}', space=vmem, size = 0x20000, scoped, tag = 'input window, operand 4, single buffered']
    #allocation9 [shape = 'u8[65536]{0}', space=vmem, size = 0x10000, scoped, tag = 'input window, operand 6, single buffered']
    #allocation10 [shape = 's32[1]{0}', space=sflag, size = 0x4, scoped, tag = 'scoped memory for tpu_custom_call.1']
    #allocation11 [shape = 'u8[16384]{0}', space=vmem, size = 0x4000, scoped, tag = 'output window, operand 0']
    %14 = vsyncpa [#allocation4], 0
    %s15 = scalar_lea.sflag [#allocation4], 1
    %16 = vsyncpa %s15, 0
    %17 = vsyncpa [#allocation7], 0
    %18 = vsyncpa [#allocation10], 0
    %19 = vsyncpa [#allocation5], 0
    %s20 = scalar_lea.sflag [#allocation5], 1
    %21 = vsyncpa %s20, 0
    loop: start=0, step=1, limit=6
    $region2: #{tpu_custom_call.1} parent=1 // loop_pre_header
      _
    $region3: #{tpu_custom_call.1} parent=1 // loop_header
      %s23 = sphi 0, %s27
      %p24 = scmp.ge.s32.totalorder %s23, 6
      %s31 = sphi 0, %s31
      %s33 = sphi 0, %s31
      %s34 = sphi 0, %s33
      %s48 = sphi 0, %s34
      %s54 = sphi 0, %s56
      %s57 = sphi 0, %s54
      %s58 = sphi 0, %s57
      %s74 = sphi 0, %s58
      %s78 = sphi 0, %s78
      %s80 = sphi 0, %s78
      %s81 = sphi 0, %s80
      %s95 = sphi 0, %s81
      %s99 = sphi 0, %s99
      %s101 = sphi 0, %s99
      %s102 = sphi 0, %s101
      %s116 = sphi 0, %s102
      %s120 = sphi 0, %s120
      %s122 = sphi 0, %s120
      %s123 = sphi 0, %s122
      %s137 = sphi 0, %s123
      %s141 = sphi 0, %s141
      %s143 = sphi 0, %s141
      %s144 = sphi 0, %s143
      %s158 = sphi 0, %s144
      %s162 = sphi 0, %s162
      %s164 = sphi 0, %s162
      %s165 = sphi 0, %s164
      %s179 = sphi 0, %s165
      %s183 = sphi 0, %s183
      %s185 = sphi 0, %s183
      %s186 = sphi 0, %s185
      %s200 = sphi 0, %s186
      %s206 = sphi 0, %s208
      %s209 = sphi 0, %s206
      %s210 = sphi 0, %s209
      %s226 = sphi 0, %s210
    $region4: #{tpu_custom_call.1} parent=1 // loop_header_branch
      %26 = sbr.rel (%p24) target = $region8
    $region5: #{tpu_custom_call.1} parent=1 // loop_body
      %s28 = ssub.s32 %s23, 1
      %s29 = ssub.s32 %s23, 2
      %s30 = sadd.s32 %s23, 1
      %s32 = sadd.s32 %s31, 1
      %p35 = scmp.eq.s32.totalorder %s23, 3
      %p36 = scmp.ne.s32.totalorder %s31, %s33
      %p37 = scmp.eq.s32.totalorder %s23, 0
      %p38 = por %p36, %p37
      %p39 = scmp.ne.s32.totalorder %s31, %s33
      %p40 = scmp.eq.s32.totalorder %s28, 3
      %p41 = por %p39, %p40
      %p42 = scmp.ne.s32.totalorder %s33, %s34
      %p43 = scmp.eq.s32.totalorder %s28, 0
      %p44 = por %p42, %p43
      %p45 = scmp.ne.s32.totalorder %s33, %s34
      %p46 = scmp.eq.s32.totalorder %s29, 3
      %p47 = por %p45, %p46
      %p49 = scmp.ne.s32.totalorder %s34, %s48
      %p50 = scmp.eq.s32.totalorder %s29, 0
      %p51 = por %p49, %p50
      %s52 = ssub.s32 %s23, %s30
      %p53 = scmp.eq.s32.totalorder %s52, 0
      %s55 = sadd.s32 %s54, 1
      %s56 = scalar_select %p53, %s54, %s55
      %p59 = pneg %p53
      %p60 = scmp.eq.s32.totalorder %s23, 3
      %p61 = por %p59, %p60
      %p62 = scmp.ne.s32.totalorder %s54, %s57
      %p63 = scmp.eq.s32.totalorder %s23, 0
      %p64 = por %p62, %p63
      %p65 = scmp.ne.s32.totalorder %s54, %s57
      %p66 = scmp.eq.s32.totalorder %s28, 3
      %p67 = por %p65, %p66
      %p68 = scmp.ne.s32.totalorder %s57, %s58
      %p69 = scmp.eq.s32.totalorder %s28, 0
      %p70 = por %p68, %p69
      %p71 = scmp.ne.s32.totalorder %s57, %s58
      %p72 = scmp.eq.s32.totalorder %s29, 3
      %p73 = por %p71, %p72
      %p75 = scmp.ne.s32.totalorder %s58, %s74
      %p76 = scmp.eq.s32.totalorder %s29, 0
      %p77 = por %p75, %p76
      %s79 = sadd.s32 %s78, 1
      %p82 = scmp.eq.s32.totalorder %s23, 3
      %p83 = scmp.ne.s32.totalorder %s78, %s80
      %p84 = scmp.eq.s32.totalorder %s23, 0
      %p85 = por %p83, %p84
      %p86 = scmp.ne.s32.totalorder %s78, %s80
      %p87 = scmp.eq.s32.totalorder %s28, 3
      %p88 = por %p86, %p87
      %p89 = scmp.ne.s32.totalorder %s80, %s81
      %p90 = scmp.eq.s32.totalorder %s28, 0
      %p91 = por %p89, %p90
      %p92 = scmp.ne.s32.totalorder %s80, %s81
      %p93 = scmp.eq.s32.totalorder %s29, 3
      %p94 = por %p92, %p93
      %p96 = scmp.ne.s32.totalorder %s81, %s95
      %p97 = scmp.eq.s32.totalorder %s29, 0
      %p98 = por %p96, %p97
      %s100 = sadd.s32 %s99, 1
      %p103 = scmp.eq.s32.totalorder %s23, 3
      %p104 = scmp.ne.s32.totalorder %s99, %s101
      %p105 = scmp.eq.s32.totalorder %s23, 0
      %p106 = por %p104, %p105
      %p107 = scmp.ne.s32.totalorder %s99, %s101
      %p108 = scmp.eq.s32.totalorder %s28, 3
      %p109 = por %p107, %p108
      %p110 = scmp.ne.s32.totalorder %s101, %s102
      %p111 = scmp.eq.s32.totalorder %s28, 0
      %p112 = por %p110, %p111
      %p113 = scmp.ne.s32.totalorder %s101, %s102
      %p114 = scmp.eq.s32.totalorder %s29, 3
      %p115 = por %p113, %p114
      %p117 = scmp.ne.s32.totalorder %s102, %s116
      %p118 = scmp.eq.s32.totalorder %s29, 0
      %p119 = por %p117, %p118
      %s121 = sadd.s32 %s120, 1
      %p124 = scmp.eq.s32.totalorder %s23, 3
      %p125 = scmp.ne.s32.totalorder %s120, %s122
      %p126 = scmp.eq.s32.totalorder %s23, 0
      %p127 = por %p125, %p126
      %p128 = scmp.ne.s32.totalorder %s120, %s122
      %p129 = scmp.eq.s32.totalorder %s28, 3
      %p130 = por %p128, %p129
      %p131 = scmp.ne.s32.totalorder %s122, %s123
      %p132 = scmp.eq.s32.totalorder %s28, 0
      %p133 = por %p131, %p132
      %p134 = scmp.ne.s32.totalorder %s122, %s123
      %p135 = scmp.eq.s32.totalorder %s29, 3
      %p136 = por %p134, %p135
      %p138 = scmp.ne.s32.totalorder %s123, %s137
      %p139 = scmp.eq.s32.totalorder %s29, 0
      %p140 = por %p138, %p139
      %s142 = sadd.s32 %s141, 1
      %p145 = scmp.eq.s32.totalorder %s23, 3
      %p146 = scmp.ne.s32.totalorder %s141, %s143
      %p147 = scmp.eq.s32.totalorder %s23, 0
      %p148 = por %p146, %p147
      %p149 = scmp.ne.s32.totalorder %s141, %s143
      %p150 = scmp.eq.s32.totalorder %s28, 3
      %p151 = por %p149, %p150
      %p152 = scmp.ne.s32.totalorder %s143, %s144
      %p153 = scmp.eq.s32.totalorder %s28, 0
      %p154 = por %p152, %p153
      %p155 = scmp.ne.s32.totalorder %s143, %s144
      %p156 = scmp.eq.s32.totalorder %s29, 3
      %p157 = por %p155, %p156
      %p159 = scmp.ne.s32.totalorder %s144, %s158
      %p160 = scmp.eq.s32.totalorder %s29, 0
      %p161 = por %p159, %p160
      %s163 = sadd.s32 %s162, 1
      %p166 = scmp.eq.s32.totalorder %s23, 3
      %p167 = scmp.ne.s32.totalorder %s162, %s164
      %p168 = scmp.eq.s32.totalorder %s23, 0
      %p169 = por %p167, %p168
      %p170 = scmp.ne.s32.totalorder %s162, %s164
      %p171 = scmp.eq.s32.totalorder %s28, 3
      %p172 = por %p170, %p171
      %p173 = scmp.ne.s32.totalorder %s164, %s165
      %p174 = scmp.eq.s32.totalorder %s28, 0
      %p175 = por %p173, %p174
      %p176 = scmp.ne.s32.totalorder %s164, %s165
      %p177 = scmp.eq.s32.totalorder %s29, 3
      %p178 = por %p176, %p177
      %p180 = scmp.ne.s32.totalorder %s165, %s179
      %p181 = scmp.eq.s32.totalorder %s29, 0
      %p182 = por %p180, %p181
      %s184 = sadd.s32 %s183, 1
      %p187 = scmp.eq.s32.totalorder %s23, 3
      %p188 = scmp.ne.s32.totalorder %s183, %s185
      %p189 = scmp.eq.s32.totalorder %s23, 0
      %p190 = por %p188, %p189
      %p191 = scmp.ne.s32.totalorder %s183, %s185
      %p192 = scmp.eq.s32.totalorder %s28, 3
      %p193 = por %p191, %p192
      %p194 = scmp.ne.s32.totalorder %s185, %s186
      %p195 = scmp.eq.s32.totalorder %s28, 0
      %p196 = por %p194, %p195
      %p197 = scmp.ne.s32.totalorder %s185, %s186
      %p198 = scmp.eq.s32.totalorder %s29, 3
      %p199 = por %p197, %p198
      %p201 = scmp.ne.s32.totalorder %s186, %s200
      %p202 = scmp.eq.s32.totalorder %s29, 0
      %p203 = por %p201, %p202
      %s204 = ssub.s32 %s23, %s30
      %p205 = scmp.eq.s32.totalorder %s204, 0
      %s207 = sadd.s32 %s206, 1
      %s208 = scalar_select %p205, %s206, %s207
      %p211 = pneg %p205
      %p212 = scmp.eq.s32.totalorder %s23, 3
      %p213 = por %p211, %p212
      %p214 = scmp.ne.s32.totalorder %s206, %s209
      %p215 = scmp.eq.s32.totalorder %s23, 0
      %p216 = por %p214, %p215
      %p217 = scmp.ne.s32.totalorder %s206, %s209
      %p218 = scmp.eq.s32.totalorder %s28, 3
      %p219 = por %p217, %p218
      %p220 = scmp.ne.s32.totalorder %s209, %s210
      %p221 = scmp.eq.s32.totalorder %s28, 0
      %p222 = por %p220, %p221
      %p223 = scmp.ne.s32.totalorder %s209, %s210
      %p224 = scmp.eq.s32.totalorder %s29, 3
      %p225 = por %p223, %p224
      %p227 = scmp.ne.s32.totalorder %s210, %s226
      %p228 = scmp.eq.s32.totalorder %s29, 0
      %p229 = por %p227, %p228
      %p230 = scmp.le.s32.totalorder 1, %s23
      %p231 = scmp.lt.s32.totalorder %s23, 5
      %p232 = pnand %p230, %p231
      %p233 = pneg %p232
      // Predicated region
      $region9: #{tpu_custom_call.1} parent=5 // pred_check
        _
      $region10: #{tpu_custom_call.1} parent=5 // pred_check_branch
        %235 = sbr.rel (%p232) target = $region12
      $region11: #{tpu_custom_call.1} parent=5 // pred_region
        %s236 = ssub.s32 %s23, 1
        // Predicated region
        $region13: #{tpu_custom_call.1} parent=11 // pred_check
          %p237 = pneg %p44
        $region14: #{tpu_custom_call.1} parent=11 // pred_check_branch
          %239 = sbr.rel (%p237) target = $region16
        $region15: #{tpu_custom_call.1} parent=11 // pred_region
          _
        $region16: #{tpu_custom_call.1} parent=11 // pred_fallthru
          _
        // Predicated region
        $region17: #{tpu_custom_call.1} parent=11 // pred_check
          %p240 = pneg %p91
        $region18: #{tpu_custom_call.1} parent=11 // pred_check_branch
          %242 = sbr.rel (%p240) target = $region20
        $region19: #{tpu_custom_call.1} parent=11 // pred_region
          %s244 = ssub.s32 2048, 2048
          %245 = vsyncadd [#allocation7], %s244
          %s246 = sshll.u32 [#allocation6], 4
          %s247 = int_to_ptr.vmem [resolvable:$true] %s246
          %252 = dma.hbm_to_vmem [thread:$0]  %s2, 2048, %s247, [#allocation7], 128, 128, 8
        $region20: #{tpu_custom_call.1} parent=11 // pred_fallthru
          _
        // Predicated region
        $region21: #{tpu_custom_call.1} parent=11 // pred_check
          %p253 = pneg %p112
        $region22: #{tpu_custom_call.1} parent=11 // pred_check_branch
          %255 = sbr.rel (%p253) target = $region24
        $region23: #{tpu_custom_call.1} parent=11 // pred_region
          _
        $region24: #{tpu_custom_call.1} parent=11 // pred_fallthru
          _
        // Predicated region
        $region25: #{tpu_custom_call.1} parent=11 // pred_check
          %p256 = pneg %p133
        $region26: #{tpu_custom_call.1} parent=11 // pred_check_branch
          %258 = sbr.rel (%p256) target = $region28
        $region27: #{tpu_custom_call.1} parent=11 // pred_region
          %s260 = ssub.s32 4096, 4096
          %261 = vsyncadd [#allocation7], %s260
          %s262 = sshll.u32 [#allocation8], 4
          %s263 = int_to_ptr.vmem [resolvable:$true] %s262
          %268 = dma.hbm_to_vmem [thread:$0]  %s4, 4096, %s263, [#allocation7], 128, 128, 8
        $region28: #{tpu_custom_call.1} parent=11 // pred_fallthru
          _
        // Predicated region
        $region29: #{tpu_custom_call.1} parent=11 // pred_check
          %p269 = pneg %p154
        $region30: #{tpu_custom_call.1} parent=11 // pred_check_branch
          %271 = sbr.rel (%p269) target = $region32
        $region31: #{tpu_custom_call.1} parent=11 // pred_region
          _
        $region32: #{tpu_custom_call.1} parent=11 // pred_fallthru
          _
        // Predicated region
        $region33: #{tpu_custom_call.1} parent=11 // pred_check
          %p272 = pneg %p175
        $region34: #{tpu_custom_call.1} parent=11 // pred_check_branch
          %274 = sbr.rel (%p272) target = $region36
        $region35: #{tpu_custom_call.1} parent=11 // pred_region
          %s276 = ssub.s32 2048, 2048
          %277 = vsyncadd [#allocation10], %s276
          %s278 = sshll.u32 [#allocation9], 4
          %s279 = int_to_ptr.vmem [resolvable:$true] %s278
          %284 = dma.hbm_to_vmem [thread:$0]  %s6, 2048, %s279, [#allocation10], 64, 64, 4
        $region36: #{tpu_custom_call.1} parent=11 // pred_fallthru
          _
        // Predicated region
        $region37: #{tpu_custom_call.1} parent=11 // pred_check
          %p285 = pneg %p196
        $region38: #{tpu_custom_call.1} parent=11 // pred_check_branch
          %287 = sbr.rel (%p285) target = $region40
        $region39: #{tpu_custom_call.1} parent=11 // pred_region
          _
        $region40: #{tpu_custom_call.1} parent=11 // pred_fallthru
          _
      $region12: #{tpu_custom_call.1} parent=5 // pred_fallthru
        _
      %p288 = scmp.lt.s32.totalorder %s23, 4
      // Predicated region
      $region41: #{tpu_custom_call.1} parent=5 // pred_check
        %p289 = pneg %p288
      $region42: #{tpu_custom_call.1} parent=5 // pred_check_branch
        %291 = sbr.rel (%p289) target = $region44
      $region43: #{tpu_custom_call.1} parent=5 // pred_region
        // Predicated region
        $region45: #{tpu_custom_call.1} parent=43 // pred_check
          %p292 = pneg %p64
        $region46: #{tpu_custom_call.1} parent=43 // pred_check_branch
          %294 = sbr.rel (%p292) target = $region48
        $region47: #{tpu_custom_call.1} parent=43 // pred_region
          %s295 = sand.u32 %s54, 1
          %s296 = scalar_lea.sflag [#allocation4], %s295
          %s297 = sand.u32 %s54, 1
          %s298 = smul.addr %s297, 8
          %s299 = scalar_lea.vmem [#allocation3], %s298
          %s300 = smul.u32 2, %s23
          %s302 = ssub.s32 128, 128
          %303 = vsyncadd %s296, %s302
          %s304 = smul.addr %s300, 64
          %s305 = scalar_lea.hbm %s1, %s304
          %s306 = sshll.u32 %s299, 4
          %s307 = int_to_ptr.vmem [resolvable:$true] %s306
          %312 = dma.hbm_to_vmem [thread:$0]  %s305, 128, %s307, %s296, 64, 64, 4
        $region48: #{tpu_custom_call.1} parent=43 // pred_fallthru
          _
      $region44: #{tpu_custom_call.1} parent=5 // pred_fallthru
        _
      %p313 = scmp.le.s32.totalorder 1, %s23
      %p314 = scmp.lt.s32.totalorder %s23, 5
      %p315 = pnand %p313, %p314
      %p316 = pneg %p315
      // Predicated region
      $region49: #{tpu_custom_call.1} parent=5 // pred_check
        _
      $region50: #{tpu_custom_call.1} parent=5 // pred_check_branch
        %318 = sbr.rel (%p315) target = $region52
      $region51: #{tpu_custom_call.1} parent=5 // pred_region
        %s319 = ssub.s32 %s23, 1
        %s320 = sand.u32 %s57, 1
        %s321 = scalar_lea.sflag [#allocation4], %s320
        %s322 = sand.u32 %s57, 1
        %s323 = smul.addr %s322, 8
        %s324 = scalar_lea.vmem [#allocation3], %s323
        // Predicated region
        $region53: #{tpu_custom_call.1} parent=51 // pred_check
          %p325 = pneg %p70
        $region54: #{tpu_custom_call.1} parent=51 // pred_check_branch
          %327 = sbr.rel (%p325) target = $region56
        $region55: #{tpu_custom_call.1} parent=51 // pred_region
          %328 = dma.done %s321, 128
        $region56: #{tpu_custom_call.1} parent=51 // pred_fallthru
          _
        // Predicated region
        $region57: #{tpu_custom_call.1} parent=51 // pred_check
          %p329 = pneg %p91
        $region58: #{tpu_custom_call.1} parent=51 // pred_check_branch
          %331 = sbr.rel (%p329) target = $region60
        $region59: #{tpu_custom_call.1} parent=51 // pred_region
          %332 = dma.done [#allocation7], 2048
        $region60: #{tpu_custom_call.1} parent=51 // pred_fallthru
          _
        // Predicated region
        $region61: #{tpu_custom_call.1} parent=51 // pred_check
          %p333 = pneg %p133
        $region62: #{tpu_custom_call.1} parent=51 // pred_check_branch
          %335 = sbr.rel (%p333) target = $region64
        $region63: #{tpu_custom_call.1} parent=51 // pred_region
          %336 = dma.done [#allocation7], 4096
        $region64: #{tpu_custom_call.1} parent=51 // pred_fallthru
          _
        // Predicated region
        $region65: #{tpu_custom_call.1} parent=51 // pred_check
          %p337 = pneg %p175
        $region66: #{tpu_custom_call.1} parent=51 // pred_check_branch
          %339 = sbr.rel (%p337) target = $region68
        $region67: #{tpu_custom_call.1} parent=51 // pred_region
          %340 = dma.done [#allocation10], 2048
        $region68: #{tpu_custom_call.1} parent=51 // pred_fallthru
          _
        %p341 = pneg %p44
        %p342 = pneg %p41
        %s343 = sand.u32 %s57, 1
        %s344 = scalar_lea.sflag [#allocation4], %s343
        %s345 = sand.u32 %s57, 1
        %s346 = smul.addr %s345, 8
        %s347 = scalar_lea.vmem [#allocation3], %s346
        %p348 = pneg %p70
        %p349 = pneg %p67
        %p350 = pneg %p91
        %p351 = pneg %p88
        %p352 = pneg %p112
        %p353 = pneg %p109
        %p354 = pneg %p133
        %p355 = pneg %p130
        %p356 = pneg %p154
        %p357 = pneg %p151
        %p358 = pneg %p175
        %p359 = pneg %p172
        %p360 = pneg %p196
        %p361 = pneg %p193
        %p362 = pneg %p222
        %p363 = pneg %p219
        %s364 = sand.u32 %s209, 1
        %s365 = scalar_lea.sflag [#allocation5], %s364
        %s366 = sand.u32 %s209, 1
        %s367 = smul.addr %s366, 16
        %s368 = scalar_lea.vmem [#allocation11], %s367
        %s369 = smul.u32 2, %s28
        %s370 = smul.u32 2, %s28
        %s372 = sld [smem:[#allocation2]]
        %v373 = vld [vmem:[%s324] sm:$0xf]
        %v374 = vld [vmem:[%s324 + $0x4] sm:$0xf]
        %v375 = vld [vmem:[#allocation6] sm:$0xff]
        %v376 = vld [vmem:[#allocation6 + $0x8] sm:$0xff]
        %v377 = vld [vmem:[#allocation6 + $0x10] sm:$0xff]
        %v378 = vld [vmem:[#allocation6 + $0x18] sm:$0xff]
        %v379 = vld [vmem:[#allocation6 + $0x20] sm:$0xff]
        %v380 = vld [vmem:[#allocation6 + $0x28] sm:$0xff]
        %v381 = vld [vmem:[#allocation6 + $0x30] sm:$0xff]
        %v382 = vld [vmem:[#allocation6 + $0x38] sm:$0xff]
        %v383 = vld [vmem:[#allocation6 + $0x40] sm:$0xff]
        %v384 = vld [vmem:[#allocation6 + $0x48] sm:$0xff]
        %v385 = vld [vmem:[#allocation6 + $0x50] sm:$0xff]
        %v386 = vld [vmem:[#allocation6 + $0x58] sm:$0xff]
        %v387 = vld [vmem:[#allocation6 + $0x60] sm:$0xff]
        %v388 = vld [vmem:[#allocation6 + $0x68] sm:$0xff]
        %v389 = vld [vmem:[#allocation6 + $0x70] sm:$0xff]
        %v390 = vld [vmem:[#allocation6 + $0x78] sm:$0xff]
        %v391 = vld [vmem:[%s3] sm:$0x3]
        %v393 = vlaneseq
        %v394 = vshrl.u32 %v393, 7
        %v395 = vsub.s32 0, %v394
        %v396 = vrot.slane %v391, %v395
        %v397 = vlaneseq
        %v398 = vshrl.u32 %v397, 7
        %v399 = vsub.s32 1, %v398
        %v400 = vrot.slane %v391, %v399
        %v405 = vunpack.c.l.b16 %v373
        %v406 = vunpack.c.l.b16 %v374
        %v407 = vpack.c.b16 %v406, %v405
        %v425 = vunpack.c.l.b16 %v375
        %v426 = vunpack.c.h.b16 %v375
        %v427 = vunpack.c.l.b16 %v376
        %v428 = vunpack.c.h.b16 %v376
        %v429 = vunpack.c.l.b16 %v377
        %v430 = vunpack.c.h.b16 %v377
        %v431 = vunpack.c.l.b16 %v378
        %v432 = vunpack.c.h.b16 %v378
        %v433 = vunpack.c.l.b16 %v379
        %v434 = vunpack.c.h.b16 %v379
        %v435 = vunpack.c.l.b16 %v380
        %v436 = vunpack.c.h.b16 %v380
        %v437 = vunpack.c.l.b16 %v381
        %v438 = vunpack.c.h.b16 %v381
        %v439 = vunpack.c.l.b16 %v382
        %v440 = vunpack.c.h.b16 %v382
        %v441 = vunpack.c.l.b16 %v383
        %v442 = vunpack.c.h.b16 %v383
        %v443 = vunpack.c.l.b16 %v384
        %v444 = vunpack.c.h.b16 %v384
        %v445 = vunpack.c.l.b16 %v385
        %v446 = vunpack.c.h.b16 %v385
        %v447 = vunpack.c.l.b16 %v386
        %v448 = vunpack.c.h.b16 %v386
        %v449 = vunpack.c.l.b16 %v387
        %v450 = vunpack.c.h.b16 %v387
        %v451 = vunpack.c.l.b16 %v388
        %v452 = vunpack.c.h.b16 %v388
        %v453 = vunpack.c.l.b16 %v389
        %v454 = vunpack.c.h.b16 %v389
        %v455 = vunpack.c.l.b16 %v390
        %v456 = vunpack.c.h.b16 %v390
        %v457 = vpack.c.b16 %v427, %v425
        %v458 = vpack.c.b16 %v428, %v426
        %v459 = vpack.c.b16 %v431, %v429
        %v460 = vpack.c.b16 %v432, %v430
        %v461 = vpack.c.b16 %v435, %v433
        %v462 = vpack.c.b16 %v436, %v434
        %v463 = vpack.c.b16 %v439, %v437
        %v464 = vpack.c.b16 %v440, %v438
        %v465 = vpack.c.b16 %v443, %v441
        %v466 = vpack.c.b16 %v444, %v442
        %v467 = vpack.c.b16 %v447, %v445
        %v468 = vpack.c.b16 %v448, %v446
        %v469 = vpack.c.b16 %v451, %v449
        %v470 = vpack.c.b16 %v452, %v450
        %v471 = vpack.c.b16 %v455, %v453
        %v472 = vpack.c.b16 %v456, %v454
        %489 = vmatprep.subr.bf16.mxu0 %v472
        %490 = vmatpush1.bf16.msra.mxu0 %v471
        %491 = vmatprep.subr.bf16.mxu0 %v470
        %492 = vmatpush1.bf16.msra.mxu0 %v469
        %493 = vmatprep.subr.bf16.mxu0 %v468
        %494 = vmatpush1.bf16.msra.mxu0 %v467
        %495 = vmatprep.subr.bf16.mxu0 %v466
        %496 = vmatpush1.bf16.msra.mxu0 %v465
        %497 = vmatprep.subr.bf16.mxu0 %v464
        %498 = vmatpush1.bf16.msra.mxu0 %v463
        %499 = vmatprep.subr.bf16.mxu0 %v462
        %500 = vmatpush1.bf16.msra.mxu0 %v461
        %501 = vmatprep.subr.bf16.mxu0 %v460
        %502 = vmatpush1.bf16.msra.mxu0 %v459
        %503 = vmatprep.subr.bf16.mxu0 %v458
        %504 = vmatpush1.bf16.msra.mxu0 %v457
        %505 = vmatprep.subr.bf16.mxu0 0
        %506 = vmatpush2.bf16.msra.mxu0 0
        %507 = vmatprep.subr.bf16.mxu0 0
        %508 = vmatpush2.bf16.msra.mxu0 0
        %509 = vmatprep.subr.bf16.mxu0 0
        %510 = vmatpush2.bf16.msra.mxu0 0
        %511 = vmatprep.subr.bf16.mxu0 0
        %512 = vmatpush2.bf16.msra.mxu0 0
        %513 = vmatprep.subr.bf16.mxu0 0
        %514 = vmatpush2.bf16.msra.mxu0 0
        %515 = vmatprep.subr.bf16.mxu0 0
        %516 = vmatpush2.bf16.msra.mxu0 0
        %517 = vmatprep.subr.bf16.mxu0 0
        %518 = vmatpush2.bf16.msra.mxu0 0
        %519 = vmatprep.subr.bf16.mxu0 0
        %520 = vmatpush2.bf16.msra.mxu0 0
        %521 = vmatprep.mubr.bf16.mxu0 0
        %522 = vmatmul.mubr.bf16.gmra.mxu0 %v407
        %v523 = vpop.f32.mrf.mxu0
        %v524 = vadd.f32 %v396, %v523
        %v525 = vpop.f32.mrf.mxu0
        %v526 = vadd.f32 %v400, %v525
        %v527 = vpop.f32.mrf.mxu0
        %v528 = vadd.f32 %v396, %v527
        %v529 = vpop.f32.mrf.mxu0
        %v530 = vadd.f32 %v400, %v529
        %531 = vdwg.mxu0
        %v532 = vmax.f32 %v524, 0.0
        %v533 = vmax.f32 %v526, 0.0
        %v534 = vmax.f32 %v528, 0.0
        %v535 = vmax.f32 %v530, 0.0
        %v536 = vpack.c.bf16 %v534, %v532
        %v537 = vpack.c.bf16 %v535, %v533
        %v538 = vld [vmem:[#allocation8] sm:$0xff]
        %v539 = vld [vmem:[#allocation8 + $0x8] sm:$0xff]
        %v540 = vld [vmem:[#allocation8 + $0x10] sm:$0xff]
        %v541 = vld [vmem:[#allocation8 + $0x18] sm:$0xff]
        %v542 = vld [vmem:[#allocation8 + $0x20] sm:$0xff]
        %v543 = vld [vmem:[#allocation8 + $0x28] sm:$0xff]
        %v544 = vld [vmem:[#allocation8 + $0x30] sm:$0xff]
        %v545 = vld [vmem:[#allocation8 + $0x38] sm:$0xff]
        %v546 = vld [vmem:[#allocation8 + $0x40] sm:$0xff]
        %v547 = vld [vmem:[#allocation8 + $0x48] sm:$0xff]
        %v548 = vld [vmem:[#allocation8 + $0x50] sm:$0xff]
        %v549 = vld [vmem:[#allocation8 + $0x58] sm:$0xff]
        %v550 = vld [vmem:[#allocation8 + $0x60] sm:$0xff]
        %v551 = vld [vmem:[#allocation8 + $0x68] sm:$0xff]
        %v552 = vld [vmem:[#allocation8 + $0x70] sm:$0xff]
        %v553 = vld [vmem:[#allocation8 + $0x78] sm:$0xff]
        %v554 = vld [vmem:[#allocation8 + $0x80] sm:$0xff]
        %v555 = vld [vmem:[#allocation8 + $0x88] sm:$0xff]
        %v556 = vld [vmem:[#allocation8 + $0x90] sm:$0xff]
        %v557 = vld [vmem:[#allocation8 + $0x98] sm:$0xff]
        %v558 = vld [vmem:[#allocation8 + $0xa0] sm:$0xff]
        %v559 = vld [vmem:[#allocation8 + $0xa8] sm:$0xff]
        %v560 = vld [vmem:[#allocation8 + $0xb0] sm:$0xff]
        %v561 = vld [vmem:[#allocation8 + $0xb8] sm:$0xff]
        %v562 = vld [vmem:[#allocation8 + $0xc0] sm:$0xff]
        %v563 = vld [vmem:[#allocation8 + $0xc8] sm:$0xff]
        %v564 = vld [vmem:[#allocation8 + $0xd0] sm:$0xff]
        %v565 = vld [vmem:[#allocation8 + $0xd8] sm:$0xff]
        %v566 = vld [vmem:[#allocation8 + $0xe0] sm:$0xff]
        %v567 = vld [vmem:[#allocation8 + $0xe8] sm:$0xff]
        %v568 = vld [vmem:[#allocation8 + $0xf0] sm:$0xff]
        %v569 = vld [vmem:[#allocation8 + $0xf8] sm:$0xff]
        %v570 = vld [vmem:[%s5] sm:$0x3]
        %v572 = vlaneseq
        %v573 = vshrl.u32 %v572, 7
        %v574 = vsub.s32 0, %v573
        %v575 = vrot.slane %v570, %v574
        %v576 = vlaneseq
        %v577 = vshrl.u32 %v576, 7
        %v578 = vsub.s32 1, %v577
        %v579 = vrot.slane %v570, %v578
        %v614 = vunpack.c.l.b16 %v538
        %v615 = vunpack.c.h.b16 %v538
        %v616 = vunpack.c.l.b16 %v539
        %v617 = vunpack.c.h.b16 %v539
        %v618 = vunpack.c.l.b16 %v540
        %v619 = vunpack.c.h.b16 %v540
        %v620 = vunpack.c.l.b16 %v541
        %v621 = vunpack.c.h.b16 %v541
        %v622 = vunpack.c.l.b16 %v542
        %v623 = vunpack.c.h.b16 %v542
        %v624 = vunpack.c.l.b16 %v543
        %v625 = vunpack.c.h.b16 %v543
        %v626 = vunpack.c.l.b16 %v544
        %v627 = vunpack.c.h.b16 %v544
        %v628 = vunpack.c.l.b16 %v545
        %v629 = vunpack.c.h.b16 %v545
        %v630 = vunpack.c.l.b16 %v546
        %v631 = vunpack.c.h.b16 %v546
        %v632 = vunpack.c.l.b16 %v547
        %v633 = vunpack.c.h.b16 %v547
        %v634 = vunpack.c.l.b16 %v548
        %v635 = vunpack.c.h.b16 %v548
        %v636 = vunpack.c.l.b16 %v549
        %v637 = vunpack.c.h.b16 %v549
        %v638 = vunpack.c.l.b16 %v550
        %v639 = vunpack.c.h.b16 %v550
        %v640 = vunpack.c.l.b16 %v551
        %v641 = vunpack.c.h.b16 %v551
        %v642 = vunpack.c.l.b16 %v552
        %v643 = vunpack.c.h.b16 %v552
        %v644 = vunpack.c.l.b16 %v553
        %v645 = vunpack.c.h.b16 %v553
        %v646 = vunpack.c.l.b16 %v554
        %v647 = vunpack.c.h.b16 %v554
        %v648 = vunpack.c.l.b16 %v555
        %v649 = vunpack.c.h.b16 %v555
        %v650 = vunpack.c.l.b16 %v556
        %v651 = vunpack.c.h.b16 %v556
        %v652 = vunpack.c.l.b16 %v557
        %v653 = vunpack.c.h.b16 %v557
        %v654 = vunpack.c.l.b16 %v558
        %v655 = vunpack.c.h.b16 %v558
        %v656 = vunpack.c.l.b16 %v559
        %v657 = vunpack.c.h.b16 %v559
        %v658 = vunpack.c.l.b16 %v560
        %v659 = vunpack.c.h.b16 %v560
        %v660 = vunpack.c.l.b16 %v561
        %v661 = vunpack.c.h.b16 %v561
        %v662 = vunpack.c.l.b16 %v562
        %v663 = vunpack.c.h.b16 %v562
        %v664 = vunpack.c.l.b16 %v563
        %v665 = vunpack.c.h.b16 %v563
        %v666 = vunpack.c.l.b16 %v564
        %v667 = vunpack.c.h.b16 %v564
        %v668 = vunpack.c.l.b16 %v565
        %v669 = vunpack.c.h.b16 %v565
        %v670 = vunpack.c.l.b16 %v566
        %v671 = vunpack.c.h.b16 %v566
        %v672 = vunpack.c.l.b16 %v567
        %v673 = vunpack.c.h.b16 %v567
        %v674 = vunpack.c.l.b16 %v568
        %v675 = vunpack.c.h.b16 %v568
        %v676 = vunpack.c.l.b16 %v569
        %v677 = vunpack.c.h.b16 %v569
        %v678 = vpack.c.b16 %v616, %v614
        %v679 = vpack.c.b16 %v617, %v615
        %v680 = vpack.c.b16 %v620, %v618
        %v681 = vpack.c.b16 %v621, %v619
        %v682 = vpack.c.b16 %v624, %v622
        %v683 = vpack.c.b16 %v625, %v623
        %v684 = vpack.c.b16 %v628, %v626
        %v685 = vpack.c.b16 %v629, %v627
        %v686 = vpack.c.b16 %v632, %v630
        %v687 = vpack.c.b16 %v633, %v631
        %v688 = vpack.c.b16 %v636, %v634
        %v689 = vpack.c.b16 %v637, %v635
        %v690 = vpack.c.b16 %v640, %v638
        %v691 = vpack.c.b16 %v641, %v639
        %v692 = vpack.c.b16 %v644, %v642
        %v693 = vpack.c.b16 %v645, %v643
        %v694 = vpack.c.b16 %v648, %v646
        %v695 = vpack.c.b16 %v649, %v647
        %v696 = vpack.c.b16 %v652, %v650
        %v697 = vpack.c.b16 %v653, %v651
        %v698 = vpack.c.b16 %v656, %v654
        %v699 = vpack.c.b16 %v657, %v655
        %v700 = vpack.c.b16 %v660, %v658
        %v701 = vpack.c.b16 %v661, %v659
        %v702 = vpack.c.b16 %v664, %v662
        %v703 = vpack.c.b16 %v665, %v663
        %v704 = vpack.c.b16 %v668, %v666
        %v705 = vpack.c.b16 %v669, %v667
        %v706 = vpack.c.b16 %v672, %v670
        %v707 = vpack.c.b16 %v673, %v671
        %v708 = vpack.c.b16 %v676, %v674
        %v709 = vpack.c.b16 %v677, %v675
        %742 = vmatprep.subr.bf16.mxu0 %v693
        %743 = vmatpush1.bf16.msra.mxu0 %v692
        %744 = vmatprep.subr.bf16.mxu0 %v691
        %745 = vmatpush1.bf16.msra.mxu0 %v690
        %746 = vmatprep.subr.bf16.mxu0 %v689
        %747 = vmatpush1.bf16.msra.mxu0 %v688
        %748 = vmatprep.subr.bf16.mxu0 %v687
        %749 = vmatpush1.bf16.msra.mxu0 %v686
        %750 = vmatprep.subr.bf16.mxu0 %v685
        %751 = vmatpush1.bf16.msra.mxu0 %v684
        %752 = vmatprep.subr.bf16.mxu0 %v683
        %753 = vmatpush1.bf16.msra.mxu0 %v682
        %754 = vmatprep.subr.bf16.mxu0 %v681
        %755 = vmatpush1.bf16.msra.mxu0 %v680
        %756 = vmatprep.subr.bf16.mxu0 %v679
        %757 = vmatpush1.bf16.msra.mxu0 %v678
        %758 = vmatprep.subr.bf16.mxu0 %v709
        %759 = vmatpush2.bf16.msra.mxu0 %v708
        %760 = vmatprep.subr.bf16.mxu0 %v707
        %761 = vmatpush2.bf16.msra.mxu0 %v706
        %762 = vmatprep.subr.bf16.mxu0 %v705
        %763 = vmatpush2.bf16.msra.mxu0 %v704
        %764 = vmatprep.subr.bf16.mxu0 %v703
        %765 = vmatpush2.bf16.msra.mxu0 %v702
        %766 = vmatprep.subr.bf16.mxu0 %v701
        %767 = vmatpush2.bf16.msra.mxu0 %v700
        %768 = vmatprep.subr.bf16.mxu0 %v699
        %769 = vmatpush2.bf16.msra.mxu0 %v698
        %770 = vmatprep.subr.bf16.mxu0 %v697
        %771 = vmatpush2.bf16.msra.mxu0 %v696
        %772 = vmatprep.subr.bf16.mxu0 %v695
        %773 = vmatpush2.bf16.msra.mxu0 %v694
        %774 = vmatprep.mubr.bf16.mxu0 %v537
        %775 = vmatmul.mubr.bf16.gmra.mxu0 %v536
        %v776 = vpop.f32.mrf.mxu0
        %v777 = vadd.f32 %v575, %v776
        %v778 = vpop.f32.mrf.mxu0
        %v779 = vadd.f32 %v579, %v778
        %v780 = vpop.f32.mrf.mxu0
        %v781 = vadd.f32 %v575, %v780
        %v782 = vpop.f32.mrf.mxu0
        %v783 = vadd.f32 %v579, %v782
        %784 = vdwg.mxu0
        %v785 = vmax.f32 %v777, 0.0
        %v786 = vmax.f32 %v779, 0.0
        %v787 = vmax.f32 %v781, 0.0
        %v788 = vmax.f32 %v783, 0.0
        %v789 = vpack.c.bf16 %v787, %v785
        %v790 = vpack.c.bf16 %v788, %v786
        %v791 = vld [vmem:[#allocation9] sm:$0xf]
        %v792 = vld [vmem:[#allocation9 + $0x4] sm:$0xf]
        %v793 = vld [vmem:[#allocation9 + $0x8] sm:$0xf]
        %v794 = vld [vmem:[#allocation9 + $0xc] sm:$0xf]
        %v795 = vld [vmem:[#allocation9 + $0x10] sm:$0xf]
        %v796 = vld [vmem:[#allocation9 + $0x14] sm:$0xf]
        %v797 = vld [vmem:[#allocation9 + $0x18] sm:$0xf]
        %v798 = vld [vmem:[#allocation9 + $0x1c] sm:$0xf]
        %v799 = vld [vmem:[#allocation9 + $0x20] sm:$0xf]
        %v800 = vld [vmem:[#allocation9 + $0x24] sm:$0xf]
        %v801 = vld [vmem:[#allocation9 + $0x28] sm:$0xf]
        %v802 = vld [vmem:[#allocation9 + $0x2c] sm:$0xf]
        %v803 = vld [vmem:[#allocation9 + $0x30] sm:$0xf]
        %v804 = vld [vmem:[#allocation9 + $0x34] sm:$0xf]
        %v805 = vld [vmem:[#allocation9 + $0x38] sm:$0xf]
        %v806 = vld [vmem:[#allocation9 + $0x3c] sm:$0xf]
        %v807 = vld [vmem:[#allocation9 + $0x40] sm:$0xf]
        %v808 = vld [vmem:[#allocation9 + $0x44] sm:$0xf]
        %v809 = vld [vmem:[#allocation9 + $0x48] sm:$0xf]
        %v810 = vld [vmem:[#allocation9 + $0x4c] sm:$0xf]
        %v811 = vld [vmem:[#allocation9 + $0x50] sm:$0xf]
        %v812 = vld [vmem:[#allocation9 + $0x54] sm:$0xf]
        %v813 = vld [vmem:[#allocation9 + $0x58] sm:$0xf]
        %v814 = vld [vmem:[#allocation9 + $0x5c] sm:$0xf]
        %v815 = vld [vmem:[#allocation9 + $0x60] sm:$0xf]
        %v816 = vld [vmem:[#allocation9 + $0x64] sm:$0xf]
        %v817 = vld [vmem:[#allocation9 + $0x68] sm:$0xf]
        %v818 = vld [vmem:[#allocation9 + $0x6c] sm:$0xf]
        %v819 = vld [vmem:[#allocation9 + $0x70] sm:$0xf]
        %v820 = vld [vmem:[#allocation9 + $0x74] sm:$0xf]
        %v821 = vld [vmem:[#allocation9 + $0x78] sm:$0xf]
        %v822 = vld [vmem:[#allocation9 + $0x7c] sm:$0xf]
        %v823 = vld [vmem:[%s7] sm:$0x1]
        %v825 = vlaneseq
        %v826 = vshrl.u32 %v825, 7
        %v827 = vsub.s32 0, %v826
        %v828 = vrot.slane %v823, %v827
        %v862 = vunpack.c.l.b16 %v791
        %v863 = vunpack.c.l.b16 %v792
        %v864 = vunpack.c.l.b16 %v793
        %v865 = vunpack.c.l.b16 %v794
        %v866 = vunpack.c.l.b16 %v795
        %v867 = vunpack.c.l.b16 %v796
        %v868 = vunpack.c.l.b16 %v797
        %v869 = vunpack.c.l.b16 %v798
        %v870 = vunpack.c.l.b16 %v799
        %v871 = vunpack.c.l.b16 %v800
        %v872 = vunpack.c.l.b16 %v801
        %v873 = vunpack.c.l.b16 %v802
        %v874 = vunpack.c.l.b16 %v803
        %v875 = vunpack.c.l.b16 %v804
        %v876 = vunpack.c.l.b16 %v805
        %v877 = vunpack.c.l.b16 %v806
        %v878 = vunpack.c.l.b16 %v807
        %v879 = vunpack.c.l.b16 %v808
        %v880 = vunpack.c.l.b16 %v809
        %v881 = vunpack.c.l.b16 %v810
        %v882 = vunpack.c.l.b16 %v811
        %v883 = vunpack.c.l.b16 %v812
        %v884 = vunpack.c.l.b16 %v813
        %v885 = vunpack.c.l.b16 %v814
        %v886 = vunpack.c.l.b16 %v815
        %v887 = vunpack.c.l.b16 %v816
        %v888 = vunpack.c.l.b16 %v817
        %v889 = vunpack.c.l.b16 %v818
        %v890 = vunpack.c.l.b16 %v819
        %v891 = vunpack.c.l.b16 %v820
        %v892 = vunpack.c.l.b16 %v821
        %v893 = vunpack.c.l.b16 %v822
        %v894 = vpack.c.b16 %v863, %v862
        %v895 = vpack.c.b16 %v865, %v864
        %v896 = vpack.c.b16 %v867, %v866
        %v897 = vpack.c.b16 %v869, %v868
        %v898 = vpack.c.b16 %v871, %v870
        %v899 = vpack.c.b16 %v873, %v872
        %v900 = vpack.c.b16 %v875, %v874
        %v901 = vpack.c.b16 %v877, %v876
        %v902 = vpack.c.b16 %v879, %v878
        %v903 = vpack.c.b16 %v881, %v880
        %v904 = vpack.c.b16 %v883, %v882
        %v905 = vpack.c.b16 %v885, %v884
        %v906 = vpack.c.b16 %v887, %v886
        %v907 = vpack.c.b16 %v889, %v888
        %v908 = vpack.c.b16 %v891, %v890
        %v909 = vpack.c.b16 %v893, %v892
        %926 = vmatprep.subr.bf16.mxu0 0
        %927 = vmatpush1.bf16.msra.mxu0 %v901
        %928 = vmatprep.subr.bf16.mxu0 0
        %929 = vmatpush1.bf16.msra.mxu0 %v900
        %930 = vmatprep.subr.bf16.mxu0 0
        %931 = vmatpush1.bf16.msra.mxu0 %v899
        %932 = vmatprep.subr.bf16.mxu0 0
        %933 = vmatpush1.bf16.msra.mxu0 %v898
        %934 = vmatprep.subr.bf16.mxu0 0
        %935 = vmatpush1.bf16.msra.mxu0 %v897
        %936 = vmatprep.subr.bf16.mxu0 0
        %937 = vmatpush1.bf16.msra.mxu0 %v896
        %938 = vmatprep.subr.bf16.mxu0 0
        %939 = vmatpush1.bf16.msra.mxu0 %v895
        %940 = vmatprep.subr.bf16.mxu0 0
        %941 = vmatpush1.bf16.msra.mxu0 %v894
        %942 = vmatprep.subr.bf16.mxu0 0
        %943 = vmatpush2.bf16.msra.mxu0 %v909
        %944 = vmatprep.subr.bf16.mxu0 0
        %945 = vmatpush2.bf16.msra.mxu0 %v908
        %946 = vmatprep.subr.bf16.mxu0 0
        %947 = vmatpush2.bf16.msra.mxu0 %v907
        %948 = vmatprep.subr.bf16.mxu0 0
        %949 = vmatpush2.bf16.msra.mxu0 %v906
        %950 = vmatprep.subr.bf16.mxu0 0
        %951 = vmatpush2.bf16.msra.mxu0 %v905
        %952 = vmatprep.subr.bf16.mxu0 0
        %953 = vmatpush2.bf16.msra.mxu0 %v904
        %954 = vmatprep.subr.bf16.mxu0 0
        %955 = vmatpush2.bf16.msra.mxu0 %v903
        %956 = vmatprep.subr.bf16.mxu0 0
        %957 = vmatpush2.bf16.msra.mxu0 %v902
        %958 = vmatprep.mubr.bf16.mxu0 %v790
        %959 = vmatmul.mubr.bf16.gmra.mxu0 %v789
        %v960 = vpop.f32.mrf.mxu0
        %v961 = vadd.f32 %v828, %v960
        %v962 = vpop.f32.mrf.mxu0
        %v963 = vpop.f32.mrf.mxu0
        %v964 = vadd.f32 %v828, %v963
        %v965 = vpop.f32.mrf.mxu0
        %966 = vdwg.mxu0
        %v967 = vtanh.pop %v961
        %v968 = vtanh.pop %v964
        %v969 = vstv %s372
        %v970 = vmul.f32 %v967, %v969
        %v971 = vmul.f32 %v968, %v969
        %972 = vst [vmem:[%s368] sm:$0xff] %v970
        %973 = vst [vmem:[%s368 + $0x8] sm:$0xff] %v971
        %s974 = sand.u32 %s209, 1
        %s975 = scalar_lea.sflag [#allocation5], %s974
        %s976 = sand.u32 %s209, 1
        %s977 = smul.addr %s976, 16
        %s978 = scalar_lea.vmem [#allocation11], %s977
        // Predicated region
        $region69: #{tpu_custom_call.1} parent=51 // pred_check
          %p979 = pneg %p219
        $region70: #{tpu_custom_call.1} parent=51 // pred_check_branch
          %981 = sbr.rel (%p979) target = $region72
        $region71: #{tpu_custom_call.1} parent=51 // pred_region
          %s982 = smul.u32 2, %s28
          %s984 = ssub.s32 256, 256
          %985 = vsyncadd %s975, %s984
          %s986 = smul.addr %s982, 128
          %s987 = scalar_lea.hbm %s8, %s986
          %s988 = sshll.u32 %s978, 4
          %s989 = int_to_ptr.vmem [resolvable:$true] %s988
          %994 = dma.vmem_to_hbm [thread:$0]  %s989, 256, %s987, %s975, 128, 128, 8
        $region72: #{tpu_custom_call.1} parent=51 // pred_fallthru
          _
      $region52: #{tpu_custom_call.1} parent=5 // pred_fallthru
        _
      %p995 = scmp.le.s32.totalorder 2, %s23
      // Predicated region
      $region73: #{tpu_custom_call.1} parent=5 // pred_check
        %p996 = pneg %p995
      $region74: #{tpu_custom_call.1} parent=5 // pred_check_branch
        %998 = sbr.rel (%p996) target = $region76
      $region75: #{tpu_custom_call.1} parent=5 // pred_region
        %s999 = ssub.s32 %s23, 2
        // Predicated region
        $region77: #{tpu_custom_call.1} parent=75 // pred_check
          %p1000 = pneg %p225
        $region78: #{tpu_custom_call.1} parent=75 // pred_check_branch
          %1002 = sbr.rel (%p1000) target = $region80
        $region79: #{tpu_custom_call.1} parent=75 // pred_region
          %s1003 = sand.u32 %s210, 1
          %s1004 = scalar_lea.sflag [#allocation5], %s1003
          %s1005 = sand.u32 %s210, 1
          %s1006 = smul.addr %s1005, 16
          %s1007 = scalar_lea.vmem [#allocation11], %s1006
          %1008 = dma.done %s1004, 256
        $region80: #{tpu_custom_call.1} parent=75 // pred_fallthru
          _
      $region76: #{tpu_custom_call.1} parent=5 // pred_fallthru
        _
    $region6: #{tpu_custom_call.1} parent=1 // loop_footer
      %s27 = sadd.s32 1, %s23
    $region7: #{tpu_custom_call.1} parent=1 // loop_footer_branch
      %22 = sbr.rel target = $region3
    $region8: #{tpu_custom_call.1} parent=1 // loop_exit
      _
    %1009 = vsyncpa [#allocation4], 1
    %s1010 = scalar_lea.sflag [#allocation4], 1
    %1011 = vsyncpa %s1010, 1
    %1012 = vsyncpa [#allocation7], 1
    %1013 = vsyncpa [#allocation10], 1
    %1014 = vsyncpa [#allocation5], 1
    %s1015 = scalar_lea.sflag [#allocation5], 1
    %1016 = vsyncpa %s1015, 1

</llo_original>
